<compile_context>
chip_gen: v7x
topology: tpu7x:2x2x1
jax: 0.10.0
libtpu: 0.0.40
codegen_flags: <defaults>
</compile_context>

<pallas_src>
import math

import jax
import jax.numpy as jnp
from jax import lax
from jax.experimental import pallas as pl
from jax.experimental.pallas import tpu as pltpu


def _round_up(x, m):
    return (x + m - 1) // m * m


def _deep_cat_encoder_kernel(cat_ref, emb_t_ref, w1_ref, b1_ref,
                             w2_ref, b2_ref, w3t_ref, b3_ref, out_ref):
    """Fused (embedding-gather + 3-layer MLP head), batch on the lane axis.

    cat_ref:   [n_cols, TM] int32, indices already offset into the combined vocab
    emb_t_ref: [d_emb, V_pad] f32, transposed block-diagonal packed embeddings
    w1_ref:    [h1, d_emb]   b1_ref: [h1, 1]
    w2_ref:    [h2, h1]      b2_ref: [h2, 1]
    w3t_ref:   [h2, out]     b3_ref: [out, 1]
    out_ref:   [1, out, TM]
    """
    n_cols, tm = cat_ref.shape
    v_pad = emb_t_ref.shape[1]

    # --- multi-hot matrix, [V_pad, TM]: row v is 1 where some column hit v ---
    idx = cat_ref[...]                                             # [n_cols, TM] i32
    row_id = lax.broadcasted_iota(jnp.int32, (v_pad, tm), 0)       # sublane iota
    oh = jnp.zeros((v_pad, tm), jnp.float32)
    for c in range(n_cols):                                        # tiny static unroll
        oh = oh + jnp.where(row_id == idx[c:c + 1, :], 1.0, 0.0)

    # Exact gather-of-concatenated-embeddings: x^T = E_comb^T @ onehot^T
    x_t = jnp.dot(emb_t_ref[...], oh,
                  preferred_element_type=jnp.float32)              # [d_emb, TM]

    # Layer 1 + ReLU
    h1 = jnp.dot(w1_ref[...], x_t,
                 preferred_element_type=jnp.float32) + b1_ref[...]
    h1 = jnp.maximum(h1, 0.0)
    # TODO(synk): nn.Dropout(p=0.1) is reproduced as inference-mode identity
    # (training-mode masking would need pltpu.prng_seed / prng_random_bits).

    # Layer 2 + ReLU
    h2 = jnp.dot(w2_ref[...], h1,
                 preferred_element_type=jnp.float32) + b2_ref[...]
    h2 = jnp.maximum(h2, 0.0)

    # Output layer: for the binary (out == 1) case use VPU multiply + sublane
    # reduce instead of an N=1 MXU matmul; lane-dense [out, TM] result.
    w3t = w3t_ref[...]                                             # [h2, out]
    if w3t.shape[1] == 1:
        z = jnp.sum(h2 * w3t, axis=0, keepdims=True)               # [1, TM]
    else:
        z = lax.dot_general(w3t, h2, (((0,), (0,)), ((), ())),
                            preferred_element_type=jnp.float32)    # [out, TM]
    z = z + b3_ref[...]

    # sigmoid: exp on EUP, reciprocal (exact) instead of a VALU divide
    sig = pl.reciprocal(1.0 + jnp.exp(-z), approx=False)
    out_ref[...] = sig.reshape(out_ref.shape).astype(out_ref.dtype)


def deep_cat_encoder_forward(cat_data, emb_tables, w1, b1, w2, b2, w3, b3,
                             *, tile_m=512):
    """Forward pass of Deep_Cat_Encoder (inference).

    cat_data:   [B, n_cols] int32 categorical indices.
    emb_tables: list of [vocab_i, emb_dim_i] f32 embedding matrices.
    w1,w2,w3:   PyTorch-convention weights, shape [out_features, in_features].
    b1,b2,b3:   biases, shape [out_features].
    """
    B, n_cols = cat_data.shape
    assert n_cols == len(emb_tables)
    vocabs = [int(t.shape[0]) for t in emb_tables]
    dims = [int(t.shape[1]) for t in emb_tables]
    d_emb = sum(dims)
    out_dim = int(w3.shape[0])

    # --- batch tiling: lane axis carries the batch ---
    tm = min(int(tile_m), _round_up(max(B, 1), 128))
    b_pad = _round_up(B, tm)
    num_tiles = b_pad // tm

    # --- pack per-column embedding tables into one block-diagonal matrix ---
    v_total = sum(vocabs)
    v_pad = _round_up(v_total, 8)
    e_comb = jnp.zeros((v_pad, d_emb), jnp.float32)
    offsets = []
    v_off, d_off = 0, 0
    for tbl, v, d in zip(emb_tables, vocabs, dims):
        e_comb = e_comb.at[v_off:v_off + v, d_off:d_off + d].set(
            tbl.astype(jnp.float32))
        offsets.append(v_off)
        v_off += v
        d_off += d
    emb_t = e_comb.T                                               # [d_emb, V_pad]

    # Offset column indices into the combined vocab; transpose to [n_cols, B_pad]
    cat_off = cat_data.astype(jnp.int32) + jnp.asarray(offsets, jnp.int32)[None, :]
    cat_t = jnp.zeros((n_cols, b_pad), jnp.int32).at[:, :B].set(cat_off.T)

    # Parameters in native layout for the transposed pipeline (h^T = W x^T + b_col)
    w1f = w1.astype(jnp.float32)
    w2f = w2.astype(jnp.float32)
    w3t = w3.T.astype(jnp.float32)                                 # [h2, out]
    b1c = b1.reshape(-1, 1).astype(jnp.float32)
    b2c = b2.reshape(-1, 1).astype(jnp.float32)
    b3c = b3.reshape(-1, 1).astype(jnp.float32)

    const2 = lambda i: (0, 0)                                      # VMEM-resident params

    out = pl.pallas_call(
        _deep_cat_encoder_kernel,
        out_shape=jax.ShapeDtypeStruct((num_tiles, out_dim, tm), jnp.float32),
        grid=(num_tiles,),
        in_specs=[
            pl.BlockSpec((n_cols, tm), lambda i: (0, i)),          # index tile
            pl.BlockSpec((d_emb, v_pad), const2),                  # packed embeddings
            pl.BlockSpec(w1f.shape, const2),
            pl.BlockSpec(b1c.shape, const2),
            pl.BlockSpec(w2f.shape, const2),
            pl.BlockSpec(b2c.shape, const2),
            pl.BlockSpec(w3t.shape, const2),
            pl.BlockSpec(b3c.shape, const2),
        ],
        out_specs=pl.BlockSpec((1, out_dim, tm), lambda i: (i, 0, 0)),
        compiler_params=pltpu.CompilerParams(
            dimension_semantics=("parallel",),
            vmem_limit_bytes=32 * 1024 * 1024,
        ),
    )(cat_t, emb_t, w1f, b1c, w2f, b2c, w3t, b3c)

    # [num_tiles, out, TM] -> [B, out]
    out = jnp.transpose(out, (0, 2, 1)).reshape(b_pad, out_dim)[:B]
    return out


# ----------------------------- test harness --------------------------------

def _kaiming_uniform(key, out_f, in_f):
    # nn.init.kaiming_uniform_ defaults: a=0, fan_in, gain=sqrt(2)
    bound = math.sqrt(6.0 / in_f)
    return jax.random.uniform(key, (out_f, in_f), jnp.float32, -bound, bound)


def _linear_bias(key, out_f, in_f):
    # PyTorch nn.Linear default bias init: U(-1/sqrt(fan_in), 1/sqrt(fan_in))
    bound = 1.0 / math.sqrt(in_f)
    return jax.random.uniform(key, (out_f,), jnp.float32, -bound, bound)


def _reference_forward(cat_data, emb_tables, w1, b1, w2, b2, w3, b3):
    embs = [tbl[cat_data[:, i]] for i, tbl in enumerate(emb_tables)]
    x = jnp.concatenate(embs, axis=1).astype(jnp.float32)
    x = jnp.maximum(x @ w1.T + b1, 0.0)
    x = jnp.maximum(x @ w2.T + b2, 0.0)
    return jax.nn.sigmoid(x @ w3.T + b3)


if __name__ == "__main__":
    # Module hyper-parameters (small, consistent with __init__).
    l_levels = [(10, 4), (7, 4), (5, 8)]   # (#unique values, embedding dim) per col
    layer_sizes = [32, 16]
    output_size = 1
    batch = 8

    key = jax.random.PRNGKey(0)
    keys = jax.random.split(key, 16)

    # Embedding tables (PyTorch nn.Embedding default init: N(0, 1)).
    emb_tables = [
        jax.random.normal(keys[i], (vocab, dim), jnp.float32)
        for i, (vocab, dim) in enumerate(l_levels)
    ]
    emb_layer_size = sum(dim for _, dim in l_levels)  # 16

    # Linear layers (kaiming_uniform_ weights, default-PyTorch biases).
    w1 = _kaiming_uniform(keys[4], layer_sizes[0], emb_layer_size)
    b1 = _linear_bias(keys[5], layer_sizes[0], emb_layer_size)
    w2 = _kaiming_uniform(keys[6], layer_sizes[-1], layer_sizes[0])
    b2 = _linear_bias(keys[7], layer_sizes[-1], layer_sizes[0])
    w3 = _kaiming_uniform(keys[8], output_size, layer_sizes[-1])
    b3 = _linear_bias(keys[9], output_size, layer_sizes[-1])

    # Categorical input sample: [B, n_cols] of valid indices per column.
    cols = []
    for i, (vocab, _) in enumerate(l_levels):
        cols.append(jax.random.randint(keys[10 + i], (batch,), 0, vocab, jnp.int32))
    cat_data = jnp.stack(cols, axis=1)  # [8, 3]

    out = deep_cat_encoder_forward(cat_data, emb_tables, w1, b1, w2, b2, w3, b3)
    out = jax.block_until_ready(out)

    ref = _reference_forward(cat_data, emb_tables, w1, b1, w2, b2, w3, b3)
    assert out.shape == (batch, output_size), out.shape
    assert jnp.allclose(out, ref, atol=1e-5, rtol=1e-5), "mismatch vs reference"

    print("KERNEL_OK")
</pallas_src>

<mosaic_0001>
module attributes {stable_mosaic.version = 11 : i64} {
  func.func @_deep_cat_encoder_kernel(%arg0: i32, %arg1: memref<3x128xi32, #tpu.memory_space<vmem>>, %arg2: memref<16x24xf32, #tpu.memory_space<vmem>>, %arg3: memref<32x16xf32, #tpu.memory_space<vmem>>, %arg4: memref<32x1xf32, #tpu.memory_space<vmem>>, %arg5: memref<16x32xf32, #tpu.memory_space<vmem>>, %arg6: memref<16x1xf32, #tpu.memory_space<vmem>>, %arg7: memref<16x1xf32, #tpu.memory_space<vmem>>, %arg8: memref<1x1xf32, #tpu.memory_space<vmem>>, %arg9: memref<1x1x128xf32, #tpu.memory_space<vmem>>) attributes {dimension_semantics = [#tpu.dimension_semantics<parallel>], iteration_bounds = array<i64: 1>, scalar_prefetch = 0 : i64, scratch_operands = 0 : i64, tpu.core_type = #tpu.core_type<tc>, window_params = [{transform_indices = @transform_0, window_bounds = array<i64: 3, 128>}, {pipeline_mode = #tpu.pipeline_mode<synchronous>, transform_indices = @transform_1, window_bounds = array<i64: 16, 24>}, {pipeline_mode = #tpu.pipeline_mode<synchronous>, transform_indices = @transform_2, window_bounds = array<i64: 32, 16>}, {pipeline_mode = #tpu.pipeline_mode<synchronous>, transform_indices = @transform_3, window_bounds = array<i64: 32, 1>}, {pipeline_mode = #tpu.pipeline_mode<synchronous>, transform_indices = @transform_4, window_bounds = array<i64: 16, 32>}, {pipeline_mode = #tpu.pipeline_mode<synchronous>, transform_indices = @transform_5, window_bounds = array<i64: 16, 1>}, {pipeline_mode = #tpu.pipeline_mode<synchronous>, transform_indices = @transform_6, window_bounds = array<i64: 16, 1>}, {pipeline_mode = #tpu.pipeline_mode<synchronous>, transform_indices = @transform_7, window_bounds = array<i64: 1, 1>}, {transform_indices = @transform_8, window_bounds = array<i64: 1, 1, 128>}]} {
    %c0 = arith.constant 0 : index
    %c0_0 = arith.constant 0 : index
    %0 = vector.load %arg1[%c0, %c0_0] : memref<3x128xi32, #tpu.memory_space<vmem>>, vector<3x128xi32>
    %1 = tpu.iota {dimensions = array<i32: 0>} : vector<24x128xi32>
    %cst = arith.constant 0.000000e+00 : f32
    %2 = vector.broadcast %cst : f32 to vector<24x128xf32>
    %3 = vector.extract_strided_slice %0 {offsets = [0, 0], sizes = [1, 128], strides = [1, 1]} : vector<3x128xi32> to vector<1x128xi32>
    %4 = vector.broadcast %3 : vector<1x128xi32> to vector<24x128xi32>
    %5 = arith.cmpi eq, %1, %4 : vector<24x128xi32>
    %cst_1 = arith.constant 1.000000e+00 : f32
    %cst_2 = arith.constant 0.000000e+00 : f32
    %6 = vector.broadcast %cst_1 : f32 to vector<24x128xf32>
    %7 = vector.broadcast %cst_2 : f32 to vector<24x128xf32>
    %8 = arith.select %5, %6, %7 : vector<24x128xi1>, vector<24x128xf32>
    %9 = arith.addf %2, %8 : vector<24x128xf32>
    %10 = vector.extract_strided_slice %0 {offsets = [1, 0], sizes = [1, 128], strides = [1, 1]} : vector<3x128xi32> to vector<1x128xi32>
    %11 = vector.broadcast %10 : vector<1x128xi32> to vector<24x128xi32>
    %12 = arith.cmpi eq, %1, %11 : vector<24x128xi32>
    %cst_3 = arith.constant 1.000000e+00 : f32
    %cst_4 = arith.constant 0.000000e+00 : f32
    %13 = vector.broadcast %cst_3 : f32 to vector<24x128xf32>
    %14 = vector.broadcast %cst_4 : f32 to vector<24x128xf32>
    %15 = arith.select %12, %13, %14 : vector<24x128xi1>, vector<24x128xf32>
    %16 = arith.addf %9, %15 : vector<24x128xf32>
    %17 = vector.extract_strided_slice %0 {offsets = [2, 0], sizes = [1, 128], strides = [1, 1]} : vector<3x128xi32> to vector<1x128xi32>
    %18 = vector.broadcast %17 : vector<1x128xi32> to vector<24x128xi32>
    %19 = arith.cmpi eq, %1, %18 : vector<24x128xi32>
    %cst_5 = arith.constant 1.000000e+00 : f32
    %cst_6 = arith.constant 0.000000e+00 : f32
    %20 = vector.broadcast %cst_5 : f32 to vector<24x128xf32>
    %21 = vector.broadcast %cst_6 : f32 to vector<24x128xf32>
    %22 = arith.select %19, %20, %21 : vector<24x128xi1>, vector<24x128xf32>
    %23 = arith.addf %16, %22 : vector<24x128xf32>
    %c0_7 = arith.constant 0 : index
    %c0_8 = arith.constant 0 : index
    %24 = vector.load %arg2[%c0_7, %c0_8] : memref<16x24xf32, #tpu.memory_space<vmem>>, vector<16x24xf32>
    %cst_9 = arith.constant dense<0.000000e+00> : vector<16x128xf32>
    %25 = tpu.matmul %24, %23, %cst_9 {dimension_numbers = #tpu.dot_dimension_numbers<[1], [0], [0], [1], [0, 0, 1, 1], [], []>} : vector<16x24xf32>, vector<24x128xf32>, vector<16x128xf32> -> vector<16x128xf32>
    %c0_10 = arith.constant 0 : index
    %c0_11 = arith.constant 0 : index
    %26 = vector.load %arg3[%c0_10, %c0_11] : memref<32x16xf32, #tpu.memory_space<vmem>>, vector<32x16xf32>
    %cst_12 = arith.constant dense<0.000000e+00> : vector<32x128xf32>
    %27 = tpu.matmul %26, %25, %cst_12 {dimension_numbers = #tpu.dot_dimension_numbers<[1], [0], [0], [1], [0, 0, 1, 1], [], []>} : vector<32x16xf32>, vector<16x128xf32>, vector<32x128xf32> -> vector<32x128xf32>
    %c0_13 = arith.constant 0 : index
    %c0_14 = arith.constant 0 : index
    %28 = vector.load %arg4[%c0_13, %c0_14] : memref<32x1xf32, #tpu.memory_space<vmem>>, vector<32x1xf32>
    %29 = vector.broadcast %28 : vector<32x1xf32> to vector<32x128xf32>
    %30 = arith.addf %27, %29 : vector<32x128xf32>
    %cst_15 = arith.constant 0.000000e+00 : f32
    %31 = vector.broadcast %cst_15 : f32 to vector<32x128xf32>
    %32 = arith.maximumf %30, %31 : vector<32x128xf32>
    %c0_16 = arith.constant 0 : index
    %c0_17 = arith.constant 0 : index
    %33 = vector.load %arg5[%c0_16, %c0_17] : memref<16x32xf32, #tpu.memory_space<vmem>>, vector<16x32xf32>
    %cst_18 = arith.constant dense<0.000000e+00> : vector<16x128xf32>
    %34 = tpu.matmul %33, %32, %cst_18 {dimension_numbers = #tpu.dot_dimension_numbers<[1], [0], [0], [1], [0, 0, 1, 1], [], []>} : vector<16x32xf32>, vector<32x128xf32>, vector<16x128xf32> -> vector<16x128xf32>
    %c0_19 = arith.constant 0 : index
    %c0_20 = arith.constant 0 : index
    %35 = vector.load %arg6[%c0_19, %c0_20] : memref<16x1xf32, #tpu.memory_space<vmem>>, vector<16x1xf32>
    %36 = vector.broadcast %35 : vector<16x1xf32> to vector<16x128xf32>
    %37 = arith.addf %34, %36 : vector<16x128xf32>
    %cst_21 = arith.constant 0.000000e+00 : f32
    %38 = vector.broadcast %cst_21 : f32 to vector<16x128xf32>
    %39 = arith.maximumf %37, %38 : vector<16x128xf32>
    %c0_22 = arith.constant 0 : index
    %c0_23 = arith.constant 0 : index
    %40 = vector.load %arg7[%c0_22, %c0_23] : memref<16x1xf32, #tpu.memory_space<vmem>>, vector<16x1xf32>
    %41 = vector.broadcast %40 : vector<16x1xf32> to vector<16x128xf32>
    %42 = arith.mulf %39, %41 : vector<16x128xf32>
    %cst_24 = arith.constant dense<0.000000e+00> : vector<128xf32>
    %43 = vector.multi_reduction <add>, %42, %cst_24 [0] : vector<16x128xf32> to vector<128xf32>
    %44 = vector.shape_cast %43 : vector<128xf32> to vector<1x128xf32>
    %c0_25 = arith.constant 0 : index
    %c0_26 = arith.constant 0 : index
    %45 = vector.load %arg8[%c0_25, %c0_26] : memref<1x1xf32, #tpu.memory_space<vmem>>, vector<1x1xf32>
    %46 = vector.broadcast %45 : vector<1x1xf32> to vector<1x128xf32>
    %47 = arith.addf %44, %46 : vector<1x128xf32>
    %cst_27 = arith.constant 0.000000e+00 : f32
    %48 = vector.broadcast %cst_27 : f32 to vector<1x128xf32>
    %49 = arith.subf %48, %47 : vector<1x128xf32>
    %50 = math.exp %49 : vector<1x128xf32>
    %cst_28 = arith.constant 1.000000e+00 : f32
    %51 = vector.broadcast %cst_28 : f32 to vector<1x128xf32>
    %52 = arith.addf %51, %50 : vector<1x128xf32>
    %53 = tpu.reciprocal %52 : vector<1x128xf32> -> vector<1x128xf32>
    %54 = vector.shape_cast %53 : vector<1x128xf32> to vector<1x1x128xf32>
    %c0_29 = arith.constant 0 : index
    %c0_30 = arith.constant 0 : index
    %c0_31 = arith.constant 0 : index
    %55 = vector.load %arg9[%c0_29, %c0_30, %c0_31] : memref<1x1x128xf32, #tpu.memory_space<vmem>>, vector<1x1x128xf32>
    tpu.vector_store %arg9[%c0_29, %c0_30, %c0_31], %54 {strides = array<i32>} : memref<1x1x128xf32, #tpu.memory_space<vmem>>, vector<1x1x128xf32>,
    return
  }
  func.func @transform_0(%arg0: i32) -> (i32, i32) {
    %c0_i32 = arith.constant 0 : i32
    %c0_i32_0 = arith.constant 0 : i32
    return %c0_i32, %arg0 : i32, i32
  }
  func.func @transform_1(%arg0: i32) -> (i32, i32) {
    %c0_i32 = arith.constant 0 : i32
    %c0_i32_0 = arith.constant 0 : i32
    %c0_i32_1 = arith.constant 0 : i32
    return %c0_i32, %c0_i32_0 : i32, i32
  }
  func.func @transform_2(%arg0: i32) -> (i32, i32) {
    %c0_i32 = arith.constant 0 : i32
    %c0_i32_0 = arith.constant 0 : i32
    %c0_i32_1 = arith.constant 0 : i32
    return %c0_i32, %c0_i32_0 : i32, i32
  }
  func.func @transform_3(%arg0: i32) -> (i32, i32) {
    %c0_i32 = arith.constant 0 : i32
    %c0_i32_0 = arith.constant 0 : i32
    %c0_i32_1 = arith.constant 0 : i32
    return %c0_i32, %c0_i32_0 : i32, i32
  }
  func.func @transform_4(%arg0: i32) -> (i32, i32) {
    %c0_i32 = arith.constant 0 : i32
    %c0_i32_0 = arith.constant 0 : i32
    %c0_i32_1 = arith.constant 0 : i32
    return %c0_i32, %c0_i32_0 : i32, i32
  }
  func.func @transform_5(%arg0: i32) -> (i32, i32) {
    %c0_i32 = arith.constant 0 : i32
    %c0_i32_0 = arith.constant 0 : i32
    %c0_i32_1 = arith.constant 0 : i32
    return %c0_i32, %c0_i32_0 : i32, i32
  }
  func.func @transform_6(%arg0: i32) -> (i32, i32) {
    %c0_i32 = arith.constant 0 : i32
    %c0_i32_0 = arith.constant 0 : i32
    %c0_i32_1 = arith.constant 0 : i32
    return %c0_i32, %c0_i32_0 : i32, i32
  }
  func.func @transform_7(%arg0: i32) -> (i32, i32) {
    %c0_i32 = arith.constant 0 : i32
    %c0_i32_0 = arith.constant 0 : i32
    %c0_i32_1 = arith.constant 0 : i32
    return %c0_i32, %c0_i32_0 : i32, i32
  }
  func.func @transform_8(%arg0: i32) -> (i32, i32, i32) {
    %c0_i32 = arith.constant 0 : i32
    %c0_i32_0 = arith.constant 0 : i32
    %c0_i32_1 = arith.constant 0 : i32
    return %arg0, %c0_i32, %c0_i32_0 : i32, i32, i32
  }
}

</mosaic_0001>

<llo_original>
// kernel: tpu_custom_call.1
$region0: #{tpu_custom_call.1}
  #allocation0 [shape = 'u32[]', space=smem, size = 0x4, offset = 0x4, fixed_abs, tag = 'smem constant byte address 0x4 - core index']
  #allocation1 [shape = 'u32[144,128]{1,0:T(1,128)}', space=vmem, size = 0x12000, scoped, tag = 'internal scratch']
  #allocation2 [shape = 'f32[1,1]{1,0:T(1,128)S(1)}', space=vmem, size = 0x200, scoped, tag = 'scoped memory for tpu_custom_call.1']
  %s0 = inlined_call_operand.vmem [shape: s32[3,128], index: 0, kind: input, shape index: {}]
  %s1 = inlined_call_operand.vmem [shape: f32[16,24], index: 1, kind: input, shape index: {}]
  %s2 = inlined_call_operand.vmem [shape: f32[32,16], index: 2, kind: input, shape index: {}]
  %s3 = inlined_call_operand.vmem [shape: f32[32,1], index: 3, kind: input, shape index: {}]
  %s4 = inlined_call_operand.vmem [shape: f32[16,32], index: 4, kind: input, shape index: {}]
  %s5 = inlined_call_operand.vmem [shape: f32[16,1], index: 5, kind: input, shape index: {}]
  %s6 = inlined_call_operand.vmem [shape: f32[16,1], index: 6, kind: input, shape index: {}]
  %s7 = inlined_call_operand.<no memory space> [shape: f32[1,1], index: 7, kind: input, shape index: {}]
  %s8 = inlined_call_operand.hbm [shape: f32[1,1,128], index: 8, kind: output, shape index: {}]
  %s9 = sld [smem:[#allocation0]]
  $region42: #{tpu_custom_call.1} parent=0
    _
  %s11 = ssub.s32 1, %s9
  %s12 = scalar_select 0, %s11, %s9
  %v13 = vstv %s7
  %14 = vst [vmem:[#allocation2] sm:$0x1] %v13
  $region1: #{tpu_custom_call.1} parent=0
    #allocation3 [shape = 'u8[512]{0}', space=vmem, size = 0x400, scoped, tag = 'output window, operand 0, single buffered']
    #allocation4 [shape = 's32[1]{0}', space=sflag, size = 0x4, scoped, tag = 'scoped memory for tpu_custom_call.1']
    %15 = vsyncpa [#allocation4], 0
    // Predicated region
    $region2: #{tpu_custom_call.1} parent=1 // pred_check
      _
    $region3: #{tpu_custom_call.1} parent=1 // pred_check_branch
      %17 = sbr.rel (0) target = $region5
    $region4: #{tpu_custom_call.1} parent=1 // pred_region
      _
    $region5: #{tpu_custom_call.1} parent=1 // pred_fallthru
      _
    // Predicated region
    $region6: #{tpu_custom_call.1} parent=1 // pred_check
      _
    $region7: #{tpu_custom_call.1} parent=1 // pred_check_branch
      %19 = sbr.rel (0) target = $region9
    $region8: #{tpu_custom_call.1} parent=1 // pred_region
      _
    $region9: #{tpu_custom_call.1} parent=1 // pred_fallthru
      _
    // Predicated region
    $region10: #{tpu_custom_call.1} parent=1 // pred_check
      _
    $region11: #{tpu_custom_call.1} parent=1 // pred_check_branch
      %21 = sbr.rel (0) target = $region13
    $region12: #{tpu_custom_call.1} parent=1 // pred_region
      _
    $region13: #{tpu_custom_call.1} parent=1 // pred_fallthru
      _
    // Predicated region
    $region14: #{tpu_custom_call.1} parent=1 // pred_check
      _
    $region15: #{tpu_custom_call.1} parent=1 // pred_check_branch
      %23 = sbr.rel (0) target = $region17
    $region16: #{tpu_custom_call.1} parent=1 // pred_region
      _
    $region17: #{tpu_custom_call.1} parent=1 // pred_fallthru
      _
    // Predicated region
    $region18: #{tpu_custom_call.1} parent=1 // pred_check
      _
    $region19: #{tpu_custom_call.1} parent=1 // pred_check_branch
      %25 = sbr.rel (0) target = $region21
    $region20: #{tpu_custom_call.1} parent=1 // pred_region
      _
    $region21: #{tpu_custom_call.1} parent=1 // pred_fallthru
      _
    // Predicated region
    $region22: #{tpu_custom_call.1} parent=1 // pred_check
      _
    $region23: #{tpu_custom_call.1} parent=1 // pred_check_branch
      %27 = sbr.rel (0) target = $region25
    $region24: #{tpu_custom_call.1} parent=1 // pred_region
      _
    $region25: #{tpu_custom_call.1} parent=1 // pred_fallthru
      _
    // Predicated region
    $region26: #{tpu_custom_call.1} parent=1 // pred_check
      _
    $region27: #{tpu_custom_call.1} parent=1 // pred_check_branch
      %29 = sbr.rel (0) target = $region29
    $region28: #{tpu_custom_call.1} parent=1 // pred_region
      _
    $region29: #{tpu_custom_call.1} parent=1 // pred_fallthru
      _
    // Predicated region
    $region30: #{tpu_custom_call.1} parent=1 // pred_check
      _
    $region31: #{tpu_custom_call.1} parent=1 // pred_check_branch
      %31 = sbr.rel (0) target = $region33
    $region32: #{tpu_custom_call.1} parent=1 // pred_region
      _
    $region33: #{tpu_custom_call.1} parent=1 // pred_fallthru
      _
    %v32 = vld [vmem:[%s0] sm:$0x7]
    %v33 = vlaneseq
    %v34 = vshrl.u32 %v33, 7
    %v35 = vadd.s32 %v34, 8
    %v36 = vadd.s32 %v34, 16
    %v37 = vlaneseq
    %v38 = vshrl.u32 %v37, 7
    %v39 = vsub.s32 0, %v38
    %v40 = vrot.slane %v32, %v39
    %vm41 = vcmp.eq.s32.totalorder %v34, %v40
    %vm42 = vcmp.eq.s32.totalorder %v35, %v40
    %vm43 = vcmp.eq.s32.totalorder %v36, %v40
    %v44 = vsel %vm41, 1.0, 0.0
    %v45 = vsel %vm42, 1.0, 0.0
    %v46 = vsel %vm43, 1.0, 0.0
    %v47 = vadd.f32 %v44, 0.0
    %v48 = vadd.f32 %v45, 0.0
    %v49 = vadd.f32 %v46, 0.0
    %v50 = vlaneseq
    %v51 = vshrl.u32 %v50, 7
    %v52 = vsub.s32 1, %v51
    %v53 = vrot.slane %v32, %v52
    %vm54 = vcmp.eq.s32.totalorder %v34, %v53
    %vm55 = vcmp.eq.s32.totalorder %v35, %v53
    %vm56 = vcmp.eq.s32.totalorder %v36, %v53
    %v57 = vsel %vm54, 1.0, 0.0
    %v58 = vsel %vm55, 1.0, 0.0
    %v59 = vsel %vm56, 1.0, 0.0
    %v60 = vadd.f32 %v47, %v57
    %v61 = vadd.f32 %v48, %v58
    %v62 = vadd.f32 %v49, %v59
    %v63 = vlaneseq
    %v64 = vshrl.u32 %v63, 7
    %v65 = vsub.s32 2, %v64
    %v66 = vrot.slane %v32, %v65
    %vm67 = vcmp.eq.s32.totalorder %v34, %v66
    %vm68 = vcmp.eq.s32.totalorder %v35, %v66
    %vm69 = vcmp.eq.s32.totalorder %v36, %v66
    %v70 = vsel %vm67, 1.0, 0.0
    %v71 = vsel %vm68, 1.0, 0.0
    %v72 = vsel %vm69, 1.0, 0.0
    %v73 = vadd.f32 %v60, %v70
    %v74 = vadd.f32 %v61, %v71
    %v75 = vadd.f32 %v62, %v72
    %v76 = vld [vmem:[%s1] sm:$0xff]
    %v77 = vld [vmem:[%s1 + $0x8] sm:$0xff]
    %vm78 = vcmask 195584
    %v80 = vsel %vm78, %v76, 0
    %v83 = vsel %vm78, %v77, 0
    %85 = vmatprep.subr.mxu0 0.0
    %86 = vmatpush1.msra.mxu0 %v73
    %87 = vmatprep.subr.mxu0 0.0
    %88 = vmatpush1.msra.mxu0 %v74
    %89 = vmatprep.subr.mxu0 0.0
    %90 = vmatpush1.msra.mxu0 %v75
    %91 = vmatprep.subr.mxu0 0.0
    %92 = vmatpush1.msra.mxu0 0.0
    %93 = vmatprep.subr.mxu0 0.0
    %94 = vmatpush1.msra.mxu0 0.0
    %95 = vmatprep.subr.mxu0 0.0
    %96 = vmatpush1.msra.mxu0 0.0
    %97 = vmatprep.subr.mxu0 0.0
    %98 = vmatpush1.msra.mxu0 0.0
    %99 = vmatprep.subr.mxu0 0.0
    %100 = vmatpush1.msra.mxu0 0.0
    %101 = vmatprep.subr.mxu0 0.0
    %102 = vmatpush1.msra.mxu0 0.0
    %103 = vmatprep.subr.mxu0 0.0
    %104 = vmatpush1.msra.mxu0 0.0
    %105 = vmatprep.subr.mxu0 0.0
    %106 = vmatpush1.msra.mxu0 0.0
    %107 = vmatprep.subr.mxu0 0.0
    %108 = vmatpush1.msra.mxu0 0.0
    %109 = vmatprep.subr.mxu0 0.0
    %110 = vmatpush1.msra.mxu0 0.0
    %111 = vmatprep.subr.mxu0 0.0
    %112 = vmatpush1.msra.mxu0 0.0
    %113 = vmatprep.subr.mxu0 0.0
    %114 = vmatpush1.msra.mxu0 0.0
    %115 = vmatprep.subr.mxu0 0.0
    %116 = vmatpush1.msra.mxu0 0.0
    %117 = vmatprep.subr.mxu0 0.0
    %118 = vmatpush1.msra.mxu0 0.0
    %119 = vmatprep.subr.mxu0 0.0
    %120 = vmatpush1.msra.mxu0 0.0
    %121 = vmatprep.subr.mxu0 0.0
    %122 = vmatpush1.msra.mxu0 0.0
    %123 = vmatprep.subr.mxu0 0.0
    %124 = vmatpush1.msra.mxu0 0.0
    %125 = vmatprep.subr.mxu0 0.0
    %126 = vmatpush1.msra.mxu0 0.0
    %127 = vmatprep.subr.mxu0 0.0
    %128 = vmatpush1.msra.mxu0 0.0
    %129 = vmatprep.subr.mxu0 0.0
    %130 = vmatpush1.msra.mxu0 0.0
    %131 = vmatprep.subr.mxu0 0.0
    %132 = vmatpush1.msra.mxu0 0.0
    %133 = vmatprep.subr.mxu0 0.0
    %134 = vmatpush1.msra.mxu0 0.0
    %135 = vmatprep.subr.mxu0 0.0
    %136 = vmatpush1.msra.mxu0 0.0
    %137 = vmatprep.subr.mxu0 0.0
    %138 = vmatpush1.msra.mxu0 0.0
    %139 = vmatprep.subr.mxu0 0.0
    %140 = vmatpush1.msra.mxu0 0.0
    %141 = vmatprep.subr.mxu0 0.0
    %142 = vmatpush1.msra.mxu0 0.0
    %143 = vmatprep.subr.mxu0 0.0
    %144 = vmatpush1.msra.mxu0 0.0
    %145 = vmatprep.subr.mxu0 0.0
    %146 = vmatpush1.msra.mxu0 0.0
    %147 = vmatprep.subr.mxu0 0.0
    %148 = vmatpush1.msra.mxu0 0.0
    %149 = vmatprep.mubr.f32.mxu0 0.0
    %150 = vmatmul.mubr.f32.gmra.mrb[0].mxu0 %v80
    %v151 = vpop.f32.mrb[0].mxu0
    %v152 = vadd.f32 0.0, %v151
    %v153 = vpop.f32.mrb[0].mxu0
    %154 = vmatprep.mubr.f32.mxu0 0.0
    %155 = vmatmul.mubr.f32.gmra.mrb[0].mxu0 %v83
    %v156 = vpop.f32.mrb[0].mxu0
    %v157 = vadd.f32 0.0, %v156
    %v158 = vpop.f32.mrb[0].mxu0
    %159 = vdwg.mxu0
    %v160 = vld [vmem:[%s2] sm:$0xff]
    %v161 = vld [vmem:[%s2 + $0x8] sm:$0xff]
    %v162 = vld [vmem:[%s2 + $0x10] sm:$0xff]
    %v163 = vld [vmem:[%s2 + $0x18] sm:$0xff]
    %v164 = vld [vmem:[%s3] sm:$0xff]
    %v165 = vld [vmem:[%s3 + $0x8] sm:$0xff]
    %v166 = vld [vmem:[%s3 + $0x10] sm:$0xff]
    %v167 = vld [vmem:[%s3 + $0x18] sm:$0xff]
    %169 = vset.pattern.permute.xlu0 0
    %170 = vperm.xlu0 %169, %v164
    %v171 = vpop.permute.xlu0 %170
    %174 = vset.pattern.permute.xlu0 0
    %175 = vperm.xlu0 %174, %v165
    %v176 = vpop.permute.xlu0 %175
    %179 = vset.pattern.permute.xlu0 0
    %180 = vperm.xlu0 %179, %v166
    %v181 = vpop.permute.xlu0 %180
    %184 = vset.pattern.permute.xlu0 0
    %185 = vperm.xlu0 %184, %v167
    %v186 = vpop.permute.xlu0 %185
    %vm188 = vcmask 130048
    %v190 = vsel %vm188, %v160, 0
    %v193 = vsel %vm188, %v161, 0
    %v196 = vsel %vm188, %v162, 0
    %v199 = vsel %vm188, %v163, 0
    %201 = vmatprep.subr.mxu0 0.0
    %202 = vmatpush1.msra.mxu0 %v152
    %203 = vmatprep.subr.mxu0 0.0
    %204 = vmatpush1.msra.mxu0 %v157
    %205 = vmatprep.subr.mxu0 0.0
    %206 = vmatpush1.msra.mxu0 0.0
    %207 = vmatprep.subr.mxu0 0.0
    %208 = vmatpush1.msra.mxu0 0.0
    %209 = vmatprep.subr.mxu0 0.0
    %210 = vmatpush1.msra.mxu0 0.0
    %211 = vmatprep.subr.mxu0 0.0
    %212 = vmatpush1.msra.mxu0 0.0
    %213 = vmatprep.subr.mxu0 0.0
    %214 = vmatpush1.msra.mxu0 0.0
    %215 = vmatprep.subr.mxu0 0.0
    %216 = vmatpush1.msra.mxu0 0.0
    %217 = vmatprep.subr.mxu0 0.0
    %218 = vmatpush1.msra.mxu0 0.0
    %219 = vmatprep.subr.mxu0 0.0
    %220 = vmatpush1.msra.mxu0 0.0
    %221 = vmatprep.subr.mxu0 0.0
    %222 = vmatpush1.msra.mxu0 0.0
    %223 = vmatprep.subr.mxu0 0.0
    %224 = vmatpush1.msra.mxu0 0.0
    %225 = vmatprep.subr.mxu0 0.0
    %226 = vmatpush1.msra.mxu0 0.0
    %227 = vmatprep.subr.mxu0 0.0
    %228 = vmatpush1.msra.mxu0 0.0
    %229 = vmatprep.subr.mxu0 0.0
    %230 = vmatpush1.msra.mxu0 0.0
    %231 = vmatprep.subr.mxu0 0.0
    %232 = vmatpush1.msra.mxu0 0.0
    %233 = vmatprep.subr.mxu0 0.0
    %234 = vmatpush1.msra.mxu0 0.0
    %235 = vmatprep.subr.mxu0 0.0
    %236 = vmatpush1.msra.mxu0 0.0
    %237 = vmatprep.subr.mxu0 0.0
    %238 = vmatpush1.msra.mxu0 0.0
    %239 = vmatprep.subr.mxu0 0.0
    %240 = vmatpush1.msra.mxu0 0.0
    %241 = vmatprep.subr.mxu0 0.0
    %242 = vmatpush1.msra.mxu0 0.0
    %243 = vmatprep.subr.mxu0 0.0
    %244 = vmatpush1.msra.mxu0 0.0
    %245 = vmatprep.subr.mxu0 0.0
    %246 = vmatpush1.msra.mxu0 0.0
    %247 = vmatprep.subr.mxu0 0.0
    %248 = vmatpush1.msra.mxu0 0.0
    %249 = vmatprep.subr.mxu0 0.0
    %250 = vmatpush1.msra.mxu0 0.0
    %251 = vmatprep.subr.mxu0 0.0
    %252 = vmatpush1.msra.mxu0 0.0
    %253 = vmatprep.subr.mxu0 0.0
    %254 = vmatpush1.msra.mxu0 0.0
    %255 = vmatprep.subr.mxu0 0.0
    %256 = vmatpush1.msra.mxu0 0.0
    %257 = vmatprep.subr.mxu0 0.0
    %258 = vmatpush1.msra.mxu0 0.0
    %259 = vmatprep.subr.mxu0 0.0
    %260 = vmatpush1.msra.mxu0 0.0
    %261 = vmatprep.subr.mxu0 0.0
    %262 = vmatpush1.msra.mxu0 0.0
    %263 = vmatprep.subr.mxu0 0.0
    %264 = vmatpush1.msra.mxu0 0.0
    %265 = vmatprep.mubr.f32.mxu0 0.0
    %266 = vmatmul.mubr.f32.gmra.mrb[0].mxu0 %v190
    %v267 = vpop.f32.mrb[0].mxu0
    %v268 = vadd.f32 %v171, %v267
    %v269 = vpop.f32.mrb[0].mxu0
    %270 = vmatprep.mubr.f32.mxu0 0.0
    %271 = vmatmul.mubr.f32.gmra.mrb[0].mxu0 %v193
    %v272 = vpop.f32.mrb[0].mxu0
    %v273 = vadd.f32 %v176, %v272
    %v274 = vpop.f32.mrb[0].mxu0
    %275 = vmatprep.mubr.f32.mxu0 0.0
    %276 = vmatmul.mubr.f32.gmra.mrb[0].mxu0 %v196
    %v277 = vpop.f32.mrb[0].mxu0
    %v278 = vadd.f32 %v181, %v277
    %v279 = vpop.f32.mrb[0].mxu0
    %280 = vmatprep.mubr.f32.mxu0 0.0
    %281 = vmatmul.mubr.f32.gmra.mrb[0].mxu0 %v199
    %v282 = vpop.f32.mrb[0].mxu0
    %v283 = vadd.f32 %v186, %v282
    %v284 = vpop.f32.mrb[0].mxu0
    %285 = vdwg.mxu0
    %v286 = vmax.f32 %v268, 0.0
    %v287 = vmax.f32 %v273, 0.0
    %v288 = vmax.f32 %v278, 0.0
    %v289 = vmax.f32 %v283, 0.0
    %v290 = vld [vmem:[%s4] sm:$0xff]
    %v291 = vld [vmem:[%s4 + $0x8] sm:$0xff]
    %v292 = vld [vmem:[%s5] sm:$0xff]
    %v293 = vld [vmem:[%s5 + $0x8] sm:$0xff]
    %295 = vset.pattern.permute.xlu0 0
    %296 = vperm.xlu0 %295, %v292
    %v297 = vpop.permute.xlu0 %296
    %300 = vset.pattern.permute.xlu0 0
    %301 = vperm.xlu0 %300, %v293
    %v302 = vpop.permute.xlu0 %301
    %vm304 = vcmask 261120
    %v306 = vsel %vm304, %v290, 0
    %v309 = vsel %vm304, %v291, 0
    %311 = vmatprep.subr.mxu0 0.0
    %312 = vmatpush1.msra.mxu0 %v286
    %313 = vmatprep.subr.mxu0 0.0
    %314 = vmatpush1.msra.mxu0 %v287
    %315 = vmatprep.subr.mxu0 0.0
    %316 = vmatpush1.msra.mxu0 %v288
    %317 = vmatprep.subr.mxu0 0.0
    %318 = vmatpush1.msra.mxu0 %v289
    %319 = vmatprep.subr.mxu0 0.0
    %320 = vmatpush1.msra.mxu0 0.0
    %321 = vmatprep.subr.mxu0 0.0
    %322 = vmatpush1.msra.mxu0 0.0
    %323 = vmatprep.subr.mxu0 0.0
    %324 = vmatpush1.msra.mxu0 0.0
    %325 = vmatprep.subr.mxu0 0.0
    %326 = vmatpush1.msra.mxu0 0.0
    %327 = vmatprep.subr.mxu0 0.0
    %328 = vmatpush1.msra.mxu0 0.0
    %329 = vmatprep.subr.mxu0 0.0
    %330 = vmatpush1.msra.mxu0 0.0
    %331 = vmatprep.subr.mxu0 0.0
    %332 = vmatpush1.msra.mxu0 0.0
    %333 = vmatprep.subr.mxu0 0.0
    %334 = vmatpush1.msra.mxu0 0.0
    %335 = vmatprep.subr.mxu0 0.0
    %336 = vmatpush1.msra.mxu0 0.0
    %337 = vmatprep.subr.mxu0 0.0
    %338 = vmatpush1.msra.mxu0 0.0
    %339 = vmatprep.subr.mxu0 0.0
    %340 = vmatpush1.msra.mxu0 0.0
    %341 = vmatprep.subr.mxu0 0.0
    %342 = vmatpush1.msra.mxu0 0.0
    %343 = vmatprep.subr.mxu0 0.0
    %344 = vmatpush1.msra.mxu0 0.0
    %345 = vmatprep.subr.mxu0 0.0
    %346 = vmatpush1.msra.mxu0 0.0
    %347 = vmatprep.subr.mxu0 0.0
    %348 = vmatpush1.msra.mxu0 0.0
    %349 = vmatprep.subr.mxu0 0.0
    %350 = vmatpush1.msra.mxu0 0.0
    %351 = vmatprep.subr.mxu0 0.0
    %352 = vmatpush1.msra.mxu0 0.0
    %353 = vmatprep.subr.mxu0 0.0
    %354 = vmatpush1.msra.mxu0 0.0
    %355 = vmatprep.subr.mxu0 0.0
    %356 = vmatpush1.msra.mxu0 0.0
    %357 = vmatprep.subr.mxu0 0.0
    %358 = vmatpush1.msra.mxu0 0.0
    %359 = vmatprep.subr.mxu0 0.0
    %360 = vmatpush1.msra.mxu0 0.0
    %361 = vmatprep.subr.mxu0 0.0
    %362 = vmatpush1.msra.mxu0 0.0
    %363 = vmatprep.subr.mxu0 0.0
    %364 = vmatpush1.msra.mxu0 0.0
    %365 = vmatprep.subr.mxu0 0.0
    %366 = vmatpush1.msra.mxu0 0.0
    %367 = vmatprep.subr.mxu0 0.0
    %368 = vmatpush1.msra.mxu0 0.0
    %369 = vmatprep.subr.mxu0 0.0
    %370 = vmatpush1.msra.mxu0 0.0
    %371 = vmatprep.subr.mxu0 0.0
    %372 = vmatpush1.msra.mxu0 0.0
    %373 = vmatprep.subr.mxu0 0.0
    %374 = vmatpush1.msra.mxu0 0.0
    %375 = vmatprep.mubr.f32.mxu0 0.0
    %376 = vmatmul.mubr.f32.gmra.mrb[0].mxu0 %v306
    %v377 = vpop.f32.mrb[0].mxu0
    %v378 = vadd.f32 %v297, %v377
    %v379 = vpop.f32.mrb[0].mxu0
    %380 = vmatprep.mubr.f32.mxu0 0.0
    %381 = vmatmul.mubr.f32.gmra.mrb[0].mxu0 %v309
    %v382 = vpop.f32.mrb[0].mxu0
    %v383 = vadd.f32 %v302, %v382
    %v384 = vpop.f32.mrb[0].mxu0
    %385 = vdwg.mxu0
    %v386 = vmax.f32 %v378, 0.0
    %v387 = vmax.f32 %v383, 0.0
    %v388 = vld [vmem:[%s6] sm:$0xff]
    %v389 = vld [vmem:[%s6 + $0x8] sm:$0xff]
    %391 = vset.pattern.permute.xlu0 0
    %392 = vperm.xlu0 %391, %v388
    %v393 = vpop.permute.xlu0 %392
    %396 = vset.pattern.permute.xlu0 0
    %397 = vperm.xlu0 %396, %v389
    %v398 = vpop.permute.xlu0 %397
    %v400 = vmul.f32 %v386, %v393
    %v401 = vmul.f32 %v387, %v398
    %v402 = vadd.f32 %v400, %v401
    %v403 = vrot.slane %v402, 4
    %v404 = vadd.f32 %v402, %v403
    %v405 = vrot.slane %v404, 2
    %v406 = vadd.f32 %v404, %v405
    %v407 = vrot.slane %v406, 1
    %v408 = vadd.f32 %v406, %v407
    %v409 = vld [vmem:[#allocation2] sm:$0x1]
    %411 = vset.pattern.permute.xlu0 0
    %412 = vperm.xlu0 %411, %v409
    %v413 = vpop.permute.xlu0 %412
    %v415 = vlaneseq
    %v416 = vshrl.u32 %v415, 7
    %v417 = vsub.s32 0, %v416
    %v418 = vrot.slane %v413, %v417
    %v419 = vadd.f32 %v408, %v418
    %v420 = vsub.f32 0.0, %v419
    %v421 = vmul.f32 %v420, 1.442695
    %v422 = vpow.pop %v421
    %v423 = vadd.f32 %v422, 1.0
    %v424 = vrcp.pop %v423
    %425 = vst [vmem:[#allocation3] sm:$0x1] %v424
    // Predicated region
    $region34: #{tpu_custom_call.1} parent=1 // pred_check
      _
    $region35: #{tpu_custom_call.1} parent=1 // pred_check_branch
      %427 = sbr.rel (0) target = $region37
    $region36: #{tpu_custom_call.1} parent=1 // pred_region
      %s429 = ssub.s32 16, 16
      %430 = vsyncadd [#allocation4], %s429
      %s432 = sshll.u32 [#allocation3], 4
      %s433 = int_to_ptr.vmem [resolvable:$true] %s432
      %435 = dma.vmem_to_hbm [thread:$0]  %s433, 16, %s8, [#allocation4]
    $region37: #{tpu_custom_call.1} parent=1 // pred_fallthru
      _
    // Predicated region
    $region38: #{tpu_custom_call.1} parent=1 // pred_check
      _
    $region39: #{tpu_custom_call.1} parent=1 // pred_check_branch
      %437 = sbr.rel (0) target = $region41
    $region40: #{tpu_custom_call.1} parent=1 // pred_region
      %438 = dma.done [#allocation4], 16
    $region41: #{tpu_custom_call.1} parent=1 // pred_fallthru
      _
    %439 = vsyncpa [#allocation4], 1

</llo_original>
